<compile_context>
chip_gen: v6e
topology: v6e:2x2x1
jax: 0.10.0
libtpu: 0.0.40
codegen_flags: <defaults>
</compile_context>

<pallas_src>
import functools

import jax
import jax.numpy as jnp
from jax import lax
from jax.experimental import pallas as pl
from jax.experimental.pallas import tpu as pltpu

ALPHA = 0.25
SMOOTH = 1e-06
LANES = 128
MAX_TILE_ROWS = 1024  # (1024,128) f32 tile = 512 KiB; 2 streams dbl-buffered ≈ 2 MiB


def _round_up(a, b):
    return ((a + b - 1) // b) * b


def _focal_elementwise(x, t, alpha, smooth):
    """Elementwise focal-loss math (all f32)."""
    p = jax.nn.sigmoid(x)
    p = jnp.clip(p, smooth, 1.0 - smooth)
    alpha_w = (1.0 - alpha) + t * (2.0 * alpha - 1.0)
    focal_weight = alpha_w * jnp.where(t != 0.0, 1.0 - p, p)
    bce = -(t * jnp.log(p) + (1.0 - t) * jnp.log(1.0 - p))
    return bce * focal_weight


def _focal_sum_kernel(x_ref, t_ref, out_ref, acc_ref, *, alpha, smooth,
                      tile_rows, blocks_per_split, n_valid, needs_mask):
    """Accumulate per-split partial sums of the masked focal loss."""
    i = pl.program_id(1)  # reduction ("arbitrary") axis within this split

    @pl.when(i == 0)
    def _():
        acc_ref[...] = jnp.zeros_like(acc_ref)

    x = x_ref[...].astype(jnp.float32)
    t = t_ref[...].astype(jnp.float32)
    loss = _focal_elementwise(x, t, alpha, smooth)

    if needs_mask:
        # Validity mask built in-kernel (no extra HBM stream): global element
        # index of each (row, lane) in this tile compared against n_valid.
        block_idx = pl.program_id(0) * blocks_per_split + i
        row = lax.broadcasted_iota(jnp.int32, (tile_rows, LANES), 0)
        lane = lax.broadcasted_iota(jnp.int32, (tile_rows, LANES), 1)
        gidx = (block_idx * tile_rows + row) * LANES + lane
        loss = jnp.where(gidx < n_valid, loss, 0.0)

    # VPU-only per-step reduction into a vreg-shaped accumulator (no per-step
    # cross-lane XLU reduce, no masked 1-lane stores).
    acc_ref[...] += loss.reshape(-1, 8, LANES).sum(axis=0)

    @pl.when(i == pl.num_programs(1) - 1)
    def _():
        out_ref[0, ...] = acc_ref[...]


def _focal_map_kernel(x_ref, t_ref, o_ref, *, alpha, smooth):
    """Elementwise focal loss (reduction='none' path)."""
    x = x_ref[...].astype(jnp.float32)
    t = t_ref[...].astype(jnp.float32)
    o_ref[...] = _focal_elementwise(x, t, alpha, smooth)


def binary_focal_loss(inputs, target, alpha=ALPHA, gamma=2, reduction="mean",
                      smooth=SMOOTH):
    """Pallas TPU implementation of BinaryFocalLoss.forward."""
    del gamma  # intentionally unused: the reference forward never applies it
    orig_shape = inputs.shape
    n = inputs.size

    x_flat = inputs.reshape(-1)   # keep original dtype; cast happens in-kernel
    t_flat = target.reshape(-1)

    rows_unpadded = pl.cdiv(n, LANES)
    tile_rows = min(MAX_TILE_ROWS, _round_up(rows_unpadded, 8))
    num_blocks = pl.cdiv(rows_unpadded, tile_rows)

    if reduction in ("mean", "sum"):
        # Leading "parallel" axis: 2-way split so v7x's two TensorCores each
        # accumulate a partial (a no-op cost on single-TC v5e/v6e).
        nsplit = 2 if num_blocks >= 2 else 1
        blocks_per_split = pl.cdiv(num_blocks, nsplit)
        total_blocks = nsplit * blocks_per_split
        rows = total_blocks * tile_rows
        pad = rows * LANES - n
        if pad:
            x_flat = jnp.pad(x_flat, (0, pad))
            t_flat = jnp.pad(t_flat, (0, pad))
        x2 = x_flat.reshape(rows, LANES)
        t2 = t_flat.reshape(rows, LANES)

        tile_spec = pl.BlockSpec(
            (tile_rows, LANES), lambda c, i: (c * blocks_per_split + i, 0))

        partials = pl.pallas_call(
            functools.partial(
                _focal_sum_kernel, alpha=alpha, smooth=smooth,
                tile_rows=tile_rows, blocks_per_split=blocks_per_split,
                n_valid=n, needs_mask=(pad != 0)),
            out_shape=jax.ShapeDtypeStruct((nsplit, 8, LANES), jnp.float32),
            grid_spec=pltpu.PrefetchScalarGridSpec(
                num_scalar_prefetch=0,
                grid=(nsplit, blocks_per_split),
                in_specs=[tile_spec, tile_spec],
                out_specs=pl.BlockSpec((1, 8, LANES), lambda c, i: (c, 0, 0)),
                scratch_shapes=[pltpu.VMEM((8, LANES), jnp.float32)],
            ),
            compiler_params=pltpu.CompilerParams(
                dimension_semantics=("parallel", "arbitrary")),
        )(x2, t2)

        total = jnp.sum(partials)   # tiny cross-lane reduce, done once
        if reduction == "mean":
            return total / jnp.float32(n)
        return total

    # reduction == 'none': elementwise loss, same shape as inputs.
    rows = num_blocks * tile_rows
    pad = rows * LANES - n
    if pad:
        x_flat = jnp.pad(x_flat, (0, pad))
        t_flat = jnp.pad(t_flat, (0, pad))
    x2 = x_flat.reshape(rows, LANES)
    t2 = t_flat.reshape(rows, LANES)
    tile_spec = pl.BlockSpec((tile_rows, LANES), lambda i: (i, 0))

    loss2 = pl.pallas_call(
        functools.partial(_focal_map_kernel, alpha=alpha, smooth=smooth),
        out_shape=jax.ShapeDtypeStruct((rows, LANES), jnp.float32),
        grid_spec=pltpu.PrefetchScalarGridSpec(
            num_scalar_prefetch=0,
            grid=(num_blocks,),
            in_specs=[tile_spec, tile_spec],
            out_specs=tile_spec,
        ),
        compiler_params=pltpu.CompilerParams(
            dimension_semantics=("parallel",)),
    )(x2, t2)

    out = loss2.reshape(-1)
    if pad:
        out = out[:n]
    return out.reshape(orig_shape)


def _reference(inputs, target, alpha=ALPHA, smooth=SMOOTH, reduction="mean"):
    loss = _focal_elementwise(inputs.astype(jnp.float32),
                              target.astype(jnp.float32), alpha, smooth)
    if reduction == "mean":
        return loss.mean()
    if reduction == "sum":
        return loss.sum()
    return loss


if __name__ == "__main__":
    key = jax.random.PRNGKey(0)
    k1, k2, k3, k4, k5, k6 = jax.random.split(key, 6)

    # NCHW-style shape (like segmentation logits): batch=2, ch=4, 16x16
    shape = (2, 4, 16, 16)
    logits = jax.random.normal(k1, shape, dtype=jnp.float32)
    target = jax.random.bernoulli(k2, p=0.3, shape=shape).astype(jnp.float32)

    out_mean = jax.block_until_ready(binary_focal_loss(logits, target))
    out_sum = jax.block_until_ready(
        binary_focal_loss(logits, target, reduction="sum"))
    out_none = jax.block_until_ready(
        binary_focal_loss(logits, target, reduction="none"))

    ref_mean = _reference(logits, target, reduction="mean")
    ref_sum = _reference(logits, target, reduction="sum")
    ref_none = _reference(logits, target, reduction="none")

    assert jnp.allclose(out_mean, ref_mean, rtol=1e-5, atol=1e-6)
    assert jnp.allclose(out_sum, ref_sum, rtol=1e-5, atol=1e-5)
    assert jnp.allclose(out_none, ref_none, rtol=1e-5, atol=1e-6)

    # Ragged size (exercises the in-kernel mask path): 105 elements.
    shape_r = (3, 5, 7)
    logits_r = jax.random.normal(k3, shape_r, dtype=jnp.float32)
    target_r = jax.random.bernoulli(k4, p=0.5, shape=shape_r).astype(jnp.float32)
    out_r = jax.block_until_ready(binary_focal_loss(logits_r, target_r))
    assert jnp.allclose(out_r, _reference(logits_r, target_r), rtol=1e-5, atol=1e-6)
    out_r_none = jax.block_until_ready(
        binary_focal_loss(logits_r, target_r, reduction="none"))
    assert jnp.allclose(out_r_none, _reference(logits_r, target_r, reduction="none"),
                        rtol=1e-5, atol=1e-6)

    # Larger shape exercising the 2-way split + partial-block mask: 163840 elems.
    shape_b = (2, 4, 128, 160)
    logits_b = jax.random.normal(k5, shape_b, dtype=jnp.float32)
    target_b = jax.random.bernoulli(k6, p=0.3, shape=shape_b).astype(jnp.float32)
    out_b = jax.block_until_ready(
        binary_focal_loss(logits_b, target_b, reduction="sum"))
    assert jnp.allclose(out_b, _reference(logits_b, target_b, reduction="sum"),
                        rtol=1e-5, atol=1e-2)

    print("KERNEL_OK")
</pallas_src>

<mosaic_0001>
module attributes {stable_mosaic.version = 11 : i64} {
  func.func @_focal_sum_kernel(%arg0: i32, %arg1: i32, %arg2: memref<16x128xf32, #tpu.memory_space<vmem>>, %arg3: memref<16x128xf32, #tpu.memory_space<vmem>>, %arg4: memref<1x8x128xf32, #tpu.memory_space<vmem>>, %arg5: memref<8x128xf32, #tpu.memory_space<vmem>>) attributes {dimension_semantics = [#tpu.dimension_semantics<parallel>, #tpu.dimension_semantics<arbitrary>], iteration_bounds = array<i64: 1, 1>, scalar_prefetch = 0 : i64, scratch_operands = 1 : i64, tpu.core_type = #tpu.core_type<tc>, window_params = [{transform_indices = @transform_0, window_bounds = array<i64: 16, 128>}, {transform_indices = @transform_1, window_bounds = array<i64: 16, 128>}, {transform_indices = @transform_2, window_bounds = array<i64: 1, 8, 128>}]} {
    %c0_i32 = arith.constant 0 : i32
    %0 = arith.cmpi eq, %arg1, %c0_i32 : i32
    %1 = arith.extui %0 : i1 to i32
    %c0_i32_0 = arith.constant 0 : i32
    %2 = arith.cmpi ne, %1, %c0_i32_0 : i32
    scf.if %2 {
      %cst_20 = arith.constant 0.000000e+00 : f32
      %44 = vector.broadcast %cst_20 : f32 to vector<8x128xf32>
      %c0_21 = arith.constant 0 : index
      %c0_22 = arith.constant 0 : index
      %45 = vector.load %arg5[%c0_21, %c0_22] : memref<8x128xf32, #tpu.memory_space<vmem>>, vector<8x128xf32>
      tpu.vector_store %arg5[%c0_21, %c0_22], %44 {strides = array<i32>} : memref<8x128xf32, #tpu.memory_space<vmem>>, vector<8x128xf32>,
    } else {
    }
    %c0 = arith.constant 0 : index
    %c0_1 = arith.constant 0 : index
    %3 = vector.load %arg2[%c0, %c0_1] : memref<16x128xf32, #tpu.memory_space<vmem>>, vector<16x128xf32>
    %c0_2 = arith.constant 0 : index
    %c0_3 = arith.constant 0 : index
    %4 = vector.load %arg3[%c0_2, %c0_3] : memref<16x128xf32, #tpu.memory_space<vmem>>, vector<16x128xf32>
    %5 = arith.negf %3 : vector<16x128xf32>
    %6 = math.exp %5 : vector<16x128xf32>
    %cst = arith.constant 1.000000e+00 : f32
    %7 = vector.broadcast %cst : f32 to vector<16x128xf32>
    %8 = arith.addf %7, %6 : vector<16x128xf32>
    %9 = arith.divf %7, %8 : vector<16x128xf32>
    %cst_4 = arith.constant 9.99999997E-7 : f32
    %cst_5 = arith.constant 0.999998986 : f32
    %10 = vector.broadcast %cst_4 : f32 to vector<16x128xf32>
    %11 = arith.maximumf %10, %9 : vector<16x128xf32>
    %12 = vector.broadcast %cst_5 : f32 to vector<16x128xf32>
    %13 = arith.minimumf %12, %11 : vector<16x128xf32>
    %cst_6 = arith.constant -5.000000e-01 : f32
    %14 = vector.broadcast %cst_6 : f32 to vector<16x128xf32>
    %15 = arith.mulf %4, %14 : vector<16x128xf32>
    %cst_7 = arith.constant 7.500000e-01 : f32
    %16 = vector.broadcast %cst_7 : f32 to vector<16x128xf32>
    %17 = arith.addf %16, %15 : vector<16x128xf32>
    %cst_8 = arith.constant 0.000000e+00 : f32
    %18 = vector.broadcast %cst_8 : f32 to vector<16x128xf32>
    %19 = arith.cmpf one, %4, %18 : vector<16x128xf32>
    %cst_9 = arith.constant 1.000000e+00 : f32
    %20 = vector.broadcast %cst_9 : f32 to vector<16x128xf32>
    %21 = arith.subf %20, %13 : vector<16x128xf32>
    %22 = arith.select %19, %21, %13 : vector<16x128xi1>, vector<16x128xf32>
    %23 = arith.mulf %17, %22 : vector<16x128xf32>
    %24 = math.log %13 : vector<16x128xf32>
    %25 = arith.mulf %4, %24 : vector<16x128xf32>
    %cst_10 = arith.constant 1.000000e+00 : f32
    %26 = vector.broadcast %cst_10 : f32 to vector<16x128xf32>
    %27 = arith.subf %26, %4 : vector<16x128xf32>
    %cst_11 = arith.constant 1.000000e+00 : f32
    %28 = vector.broadcast %cst_11 : f32 to vector<16x128xf32>
    %29 = arith.subf %28, %13 : vector<16x128xf32>
    %30 = math.log %29 : vector<16x128xf32>
    %31 = arith.mulf %27, %30 : vector<16x128xf32>
    %32 = arith.addf %25, %31 : vector<16x128xf32>
    %cst_12 = arith.constant 0.000000e+00 : f32
    %33 = vector.broadcast %cst_12 : f32 to vector<16x128xf32>
    %34 = arith.subf %33, %32 : vector<16x128xf32>
    %35 = arith.mulf %34, %23 : vector<16x128xf32>
    %c0_13 = arith.constant 0 : index
    %c0_14 = arith.constant 0 : index
    %36 = vector.load %arg5[%c0_13, %c0_14] : memref<8x128xf32, #tpu.memory_space<vmem>>, vector<8x128xf32>
    %37 = vector.shape_cast %35 : vector<16x128xf32> to vector<2x8x128xf32>
    %cst_15 = arith.constant dense<0.000000e+00> : vector<8x128xf32>
    %38 = vector.multi_reduction <add>, %37, %cst_15 [0] : vector<2x8x128xf32> to vector<8x128xf32>
    %39 = arith.addf %36, %38 : vector<8x128xf32>
    %c0_16 = arith.constant 0 : index
    %c0_17 = arith.constant 0 : index
    %40 = vector.load %arg5[%c0_16, %c0_17] : memref<8x128xf32, #tpu.memory_space<vmem>>, vector<8x128xf32>
    tpu.vector_store %arg5[%c0_16, %c0_17], %39 {strides = array<i32>} : memref<8x128xf32, #tpu.memory_space<vmem>>, vector<8x128xf32>,
    %c0_i32_18 = arith.constant 0 : i32
    %41 = arith.cmpi eq, %arg1, %c0_i32_18 : i32
    %42 = arith.extui %41 : i1 to i32
    %c0_i32_19 = arith.constant 0 : i32
    %43 = arith.cmpi ne, %42, %c0_i32_19 : i32
    scf.if %43 {
      %c0_20 = arith.constant 0 : index
      %c0_21 = arith.constant 0 : index
      %44 = vector.load %arg5[%c0_20, %c0_21] : memref<8x128xf32, #tpu.memory_space<vmem>>, vector<8x128xf32>
      %c0_22 = arith.constant 0 : index
      %c0_23 = arith.constant 0 : index
      %c0_24 = arith.constant 0 : index
      %45 = vector.load %arg4[%c0_22, %c0_23, %c0_24] : memref<1x8x128xf32, #tpu.memory_space<vmem>>, vector<1x8x128xf32>
      %46 = vector.shape_cast %45 : vector<1x8x128xf32> to vector<8x128xf32>
      %47 = vector.shape_cast %44 : vector<8x128xf32> to vector<1x8x128xf32>
      tpu.vector_store %arg4[%c0_22, %c0_23, %c0_24], %47 {strides = array<i32>} : memref<1x8x128xf32, #tpu.memory_space<vmem>>, vector<1x8x128xf32>,
    } else {
    }
    return
  }
  func.func @transform_0(%arg0: i32, %arg1: i32) -> (i32, i32) {
    %c1_i32 = arith.constant 1 : i32
    %0 = arith.muli %arg0, %c1_i32 : i32
    %1 = arith.addi %0, %arg1 : i32
    %c0_i32 = arith.constant 0 : i32
    %c0_i32_0 = arith.constant 0 : i32
    return %1, %c0_i32 : i32, i32
  }
  func.func @transform_1(%arg0: i32, %arg1: i32) -> (i32, i32) {
    %c1_i32 = arith.constant 1 : i32
    %0 = arith.muli %arg0, %c1_i32 : i32
    %1 = arith.addi %0, %arg1 : i32
    %c0_i32 = arith.constant 0 : i32
    %c0_i32_0 = arith.constant 0 : i32
    return %1, %c0_i32 : i32, i32
  }
  func.func @transform_2(%arg0: i32, %arg1: i32) -> (i32, i32, i32) {
    %c0_i32 = arith.constant 0 : i32
    %c0_i32_0 = arith.constant 0 : i32
    %c0_i32_1 = arith.constant 0 : i32
    return %arg0, %c0_i32, %c0_i32_0 : i32, i32, i32
  }
}

</mosaic_0001>

<llo_original>
// kernel: tpu_custom_call.1
$region0: #{tpu_custom_call.1}
  #allocation0 [shape = 'u32[]', space=smem, size = 0x4, offset = 0x4, fixed_abs, tag = 'smem constant byte address 0x4 - core index']
  #allocation1 [shape = 'u32[144,128]{1,0:T(1,128)}', space=vmem, size = 0x12000, scoped, tag = 'internal scratch']
  #allocation2 [shape = 'f32[8,128]{1,0:T(8,128)}', space=vmem, size = 0x1000, scoped, tag = 'scratch operand']
  %s0 = inlined_call_operand.hbm [shape: f32[16,128], index: 0, kind: input, shape index: {}]
  %s1 = inlined_call_operand.hbm [shape: f32[16,128], index: 1, kind: input, shape index: {}]
  %s2 = inlined_call_operand.hbm [shape: f32[1,8,128], index: 2, kind: output, shape index: {}]
  %s3 = sld [smem:[#allocation0]]
  $region34: #{tpu_custom_call.1} parent=0
    _
  %s5 = ssub.s32 1, %s3
  %s6 = scalar_select 0, %s5, %s3
  $region1: #{tpu_custom_call.1} parent=0
    #allocation3 [shape = 'u8[8192]{0}', space=vmem, size = 0x2000, scoped, tag = 'input window, operand 0, single buffered']
    #allocation4 [shape = 's32[1]{0}', space=sflag, size = 0x4, scoped, tag = 'scoped memory for tpu_custom_call.1']
    #allocation5 [shape = 's32[1]{0}', space=sflag, size = 0x4, scoped, tag = 'scoped memory for tpu_custom_call.1']
    #allocation6 [shape = 'u8[8192]{0}', space=vmem, size = 0x2000, scoped, tag = 'input window, operand 1, single buffered']
    #allocation7 [shape = 's32[1]{0}', space=sflag, size = 0x4, scoped, tag = 'scoped memory for tpu_custom_call.1']
    #allocation8 [shape = 'u8[4096]{0}', space=vmem, size = 0x1000, scoped, tag = 'output window, operand 0, single buffered']
    %7 = vsyncpa [#allocation4], 0
    %8 = vsyncpa [#allocation7], 0
    %9 = vsyncpa [#allocation5], 0
    // Predicated region
    $region2: #{tpu_custom_call.1} parent=1 // pred_check
      _
    $region3: #{tpu_custom_call.1} parent=1 // pred_check_branch
      %11 = sbr.rel (0) target = $region5
    $region4: #{tpu_custom_call.1} parent=1 // pred_region
      %s12 = sadd.s32 0, 0
      %s13 = smul.u32 2, %s12
      %s15 = ssub.s32 256, 256
      %16 = vsyncadd [#allocation4], %s15
      %s17 = smul.addr %s13, 128
      %s18 = scalar_lea.hbm %s0, %s17
      %s19 = sshll.u32 [#allocation3], 4
      %s20 = int_to_ptr.vmem [resolvable:$true] %s19
      %25 = dma.hbm_to_vmem [thread:$0]  %s18, 256, %s20, [#allocation4], 128, 128, 8
    $region5: #{tpu_custom_call.1} parent=1 // pred_fallthru
      _
    // Predicated region
    $region6: #{tpu_custom_call.1} parent=1 // pred_check
      _
    $region7: #{tpu_custom_call.1} parent=1 // pred_check_branch
      %27 = sbr.rel (0) target = $region9
    $region8: #{tpu_custom_call.1} parent=1 // pred_region
      %s28 = sadd.s32 0, 0
      %s29 = smul.u32 2, %s28
      %s31 = ssub.s32 256, 256
      %32 = vsyncadd [#allocation7], %s31
      %s33 = smul.addr %s29, 128
      %s34 = scalar_lea.hbm %s1, %s33
      %s35 = sshll.u32 [#allocation6], 4
      %s36 = int_to_ptr.vmem [resolvable:$true] %s35
      %41 = dma.hbm_to_vmem [thread:$0]  %s34, 256, %s36, [#allocation7], 128, 128, 8
    $region9: #{tpu_custom_call.1} parent=1 // pred_fallthru
      _
    // Predicated region
    $region10: #{tpu_custom_call.1} parent=1 // pred_check
      _
    $region11: #{tpu_custom_call.1} parent=1 // pred_check_branch
      %43 = sbr.rel (0) target = $region13
    $region12: #{tpu_custom_call.1} parent=1 // pred_region
      %44 = dma.done [#allocation4], 256
    $region13: #{tpu_custom_call.1} parent=1 // pred_fallthru
      _
    // Predicated region
    $region14: #{tpu_custom_call.1} parent=1 // pred_check
      _
    $region15: #{tpu_custom_call.1} parent=1 // pred_check_branch
      %46 = sbr.rel (0) target = $region17
    $region16: #{tpu_custom_call.1} parent=1 // pred_region
      %47 = dma.done [#allocation7], 256
    $region17: #{tpu_custom_call.1} parent=1 // pred_fallthru
      _
    %s48 = sadd.s32 0, 0
    %s49 = smul.u32 2, %s48
    %s50 = sadd.s32 0, 0
    %s51 = smul.u32 2, %s50
    %p52 = scmp.eq.s32.totalorder 0, 0
    // Predicated region
    $region18: #{tpu_custom_call.1} parent=1 // pred_check
      %p53 = pneg %p52
    $region19: #{tpu_custom_call.1} parent=1 // pred_check_branch
      %55 = sbr.rel (%p53) target = $region21
    $region20: #{tpu_custom_call.1} parent=1 // pred_region
      %56 = vst [vmem:[#allocation2] sm:$0xff] 0.0
    $region21: #{tpu_custom_call.1} parent=1 // pred_fallthru
      _
    %v57 = vld [vmem:[#allocation3] sm:$0xff]
    %v58 = vld [vmem:[#allocation3 + $0x8] sm:$0xff]
    %v59 = vld [vmem:[#allocation6] sm:$0xff]
    %v60 = vld [vmem:[#allocation6 + $0x8] sm:$0xff]
    %v61 = vxor.u32 %v57, 2147483648
    %v62 = vxor.u32 %v58, 2147483648
    %v63 = vmul.f32 %v61, 1.442695
    %v64 = vpow.pop %v63
    %v65 = vmul.f32 %v62, 1.442695
    %v66 = vpow.pop %v65
    %v67 = vadd.f32 %v64, 1.0
    %v68 = vadd.f32 %v66, 1.0
    %v69 = vrcp.pop %v67
    %v70 = vmul.f32 1.0, %v69
    %v71 = vrcp.pop %v68
    %v72 = vmul.f32 1.0, %v71
    %v73 = vmax.f32 %v70, 1e-06
    %v74 = vmax.f32 %v72, 1e-06
    %v75 = vmin.f32 %v73, 0.999999
    %v76 = vmin.f32 %v74, 0.999999
    %v77 = vmul.f32 %v59, -0.5
    %v78 = vmul.f32 %v60, -0.5
    %v79 = vadd.f32 %v77, 0.75
    %v80 = vadd.f32 %v78, 0.75
    %vm81 = vcmp.ne.f32.partialorder %v59, 0.0
    %vm82 = vcmp.ne.f32.partialorder %v60, 0.0
    %v83 = vsub.f32 1.0, %v75
    %v84 = vsub.f32 1.0, %v76
    %v85 = vsel %vm81, %v83, %v75
    %v86 = vsel %vm82, %v84, %v76
    %v87 = vmul.f32 %v79, %v85
    %v88 = vmul.f32 %v80, %v86
    %v89 = vlog2.pop %v75
    %v90 = vmul.f32 %v89, 0.6931472
    %v91 = vlog2.pop %v76
    %v92 = vmul.f32 %v91, 0.6931472
    %v93 = vmul.f32 %v59, %v90
    %v94 = vmul.f32 %v60, %v92
    %v95 = vsub.f32 1.0, %v59
    %v96 = vsub.f32 1.0, %v60
    %v97 = vlog2.pop %v83
    %v98 = vmul.f32 %v97, 0.6931472
    %v99 = vlog2.pop %v84
    %v100 = vmul.f32 %v99, 0.6931472
    %v101 = vmul.f32 %v95, %v98
    %v102 = vmul.f32 %v96, %v100
    %v103 = vadd.f32 %v93, %v101
    %v104 = vadd.f32 %v94, %v102
    %v105 = vsub.f32 0.0, %v103
    %v106 = vsub.f32 0.0, %v104
    %v107 = vmul.f32 %v105, %v87
    %v108 = vmul.f32 %v106, %v88
    %v109 = vld [vmem:[#allocation2] sm:$0xff]
    %v110 = vadd.f32 %v107, %v108
    %v111 = vadd.f32 %v109, %v110
    %112 = vst [vmem:[#allocation2] sm:$0xff] %v111
    // Predicated region
    $region22: #{tpu_custom_call.1} parent=1 // pred_check
      %p113 = pneg %p52
    $region23: #{tpu_custom_call.1} parent=1 // pred_check_branch
      %115 = sbr.rel (%p113) target = $region25
    $region24: #{tpu_custom_call.1} parent=1 // pred_region
      %v116 = vld [vmem:[#allocation2] sm:$0xff]
      %117 = vst [vmem:[#allocation8] sm:$0xff] %v116
    $region25: #{tpu_custom_call.1} parent=1 // pred_fallthru
      _
    // Predicated region
    $region26: #{tpu_custom_call.1} parent=1 // pred_check
      _
    $region27: #{tpu_custom_call.1} parent=1 // pred_check_branch
      %119 = sbr.rel (0) target = $region29
    $region28: #{tpu_custom_call.1} parent=1 // pred_region
      %s121 = ssub.s32 128, 128
      %122 = vsyncadd [#allocation5], %s121
      %s124 = sshll.u32 [#allocation8], 4
      %s125 = int_to_ptr.vmem [resolvable:$true] %s124
      %127 = dma.vmem_to_hbm [thread:$0]  %s125, 128, %s2, [#allocation5]
    $region29: #{tpu_custom_call.1} parent=1 // pred_fallthru
      _
    // Predicated region
    $region30: #{tpu_custom_call.1} parent=1 // pred_check
      _
    $region31: #{tpu_custom_call.1} parent=1 // pred_check_branch
      %129 = sbr.rel (0) target = $region33
    $region32: #{tpu_custom_call.1} parent=1 // pred_region
      %130 = dma.done [#allocation5], 128
    $region33: #{tpu_custom_call.1} parent=1 // pred_fallthru
      _
    %131 = vsyncpa [#allocation4], 1
    %132 = vsyncpa [#allocation7], 1
    %133 = vsyncpa [#allocation5], 1

</llo_original>
